<compile_context>
chip_gen: v6e
topology: v6e:2x2x1
jax: 0.10.0
libtpu: 0.0.40
codegen_flags: <defaults>
</compile_context>

<pallas_src>
import jax
import jax.numpy as jnp
from jax.experimental import pallas as pl
from jax.experimental.pallas import tpu as pltpu

NEG_FILL = -10000000000.0   # python literal (matches torch masked_fill; no captured consts)


# ----------------------------------------------------------------------------------------
# Kernel
# ----------------------------------------------------------------------------------------
def attention_kernel(hidden_ref, enc_ref, mask_ref, wh_ref, we_ref, b_ref, v_ref,
                     out_ref, hproj_ref, score_ref):
    """Grid = (batch tiles, T chunks).  Per (b, t) step:

      t == 0    : h_proj = hidden @ Wh + bias                       (kept in VMEM scratch)
      every t   : score[t*TC:(t+1)*TC, :] = (tanh(enc_chunk @ We + h_proj) * v).sum(-1)
      t == last : masked fill + stable softmax over text_len, one lane-dense (TB, T_pad) store

    enc_ref is a (TC, TB, E2) window of the *native* [T, B, E2] float32 tensor; the bf16
    cast for the MXU happens here, in-kernel (single HBM pass over the dominant tensor).
    Mask codes: 0 = keep, 1 = torch masked_fill (-1e10), 2 = lane padding (-inf, exact 0 weight).
    """
    t = pl.program_id(1)
    TC, TB, E2 = enc_ref.shape
    Dp = wh_ref.shape[1]

    @pl.when(t == 0)
    def _():
        # hidden @ Wh + bias, once per batch tile (resident across the T-chunk axis).
        hproj_ref[...] = (
            jnp.dot(hidden_ref[...].astype(wh_ref.dtype), wh_ref[...],
                    preferred_element_type=jnp.float32)
            + b_ref[...])

    # Fold (TC, TB) into the MXU M dimension.  Reshape the f32 block first (sublane-clean:
    # TB is a multiple of 8), then a single cast to bf16 for the MXU operand.
    enc = enc_ref[...].reshape(TC * TB, E2).astype(we_ref.dtype)
    e_proj = jnp.dot(enc, we_ref[...], preferred_element_type=jnp.float32)   # (TC*TB, Dp)
    e_proj = e_proj.reshape(TC, TB, Dp)

    # Post-matmul math stays f32 (v5e VPU/EUP have no bf16 path).  The v projection is a
    # broadcast-multiply + lane reduce (no degenerate N=1 matmul).
    energy = jnp.tanh(e_proj + hproj_ref[...][None, :, :])                   # (TC, TB, Dp)
    sc = jnp.sum(energy * v_ref[...][None, :, :], axis=-1)                   # (TC, TB)

    if TC % 8 == 0:
        # Chunked path: 8-aligned dynamic sublane-offset store into the score scratch.
        score_ref[pl.ds(pl.multiple_of(t * TC, 8), TC), :] = sc
    else:
        # Tile chooser only emits a non-multiple-of-8 chunk when TC == T (single chunk).
        score_ref[:TC, :] = sc

    @pl.when(t == pl.num_programs(1) - 1)
    def _():
        # (T_pad, TB) -> (TB, T_pad): one XLU transpose so masked fill, softmax and the
        # output store all run with text_len lane-dense.  Rows >= T of the scratch are
        # garbage, but the padded mask (code 2) forces them to -inf before max/exp.
        s = jnp.transpose(score_ref[...])
        m_ = mask_ref[...]
        s = jnp.where(m_ == 1, NEG_FILL, s)          # torch masked_fill(-1e10)
        s = jnp.where(m_ >= 2, -jnp.inf, s)          # lane padding: exactly zero weight
        mx = jnp.max(s, axis=-1, keepdims=True)
        e = jnp.exp(s - mx)
        out_ref[...] = (e / jnp.sum(e, axis=-1, keepdims=True)).astype(out_ref.dtype)


# ----------------------------------------------------------------------------------------
# Generation-aware knobs + tile selection (VMEM budget includes the f32 intermediates)
# ----------------------------------------------------------------------------------------
def _round_up(x, m):
    return ((x + m - 1) // m) * m


def _tpu_config():
    """Returns (two_tensorcores, vmem_limit_bytes, vmem_tiling_budget_bytes)."""
    kind = ""
    try:
        dev = jax.devices()[0]
        if dev.platform == "tpu":
            kind = dev.device_kind.lower()
    except Exception:
        pass
    if "v7" in kind or "7x" in kind:
        # v7x: 64 MiB physical / ~32 MiB scoped VMEM per TC, 2 TCs/chip -> keep >=2 batch
        # tiles so the "parallel" axis shards cores, with a tighter per-step footprint.
        return True, None, 14 << 20
    # v5e / v6e: single TC, 128 MiB physical VMEM -> fewest, fattest steps; raise the
    # scoped limit above the 16/32 MiB default so fat tiles are not rejected.
    return False, 64 << 20, 32 << 20


def _choose_tiles(B_pad, T, T_pad, E2, D_pad, *, two_cores, budget):
    """Pick (TB, TC): batch tile and T-chunk size.

    TB: fattest batch tile (fewest grid steps amortize ~0.35us/step and keep DMAs long);
        on 2-TC chips prefer >= 2 batch tiles so dimension_semantics 'parallel' shards them.
    TC: largest multiple-of-8 divisor of T (or T itself) whose per-step VMEM footprint --
        double-buffered f32 enc chunk + in-kernel bf16 copy + f32 e_proj/energy
        intermediates + score scratch + mask/out/hidden/weight blocks -- fits `budget`.
        Divisor => no ragged tail rows feeding the softmax.
    """
    def footprint(tb, tc):
        fixed = tb * T_pad * 4 * 3                      # score scratch + mask + out blocks
        fixed += tb * D_pad * 4 * 2                     # hidden block + h_proj scratch
        fixed += (D_pad + E2) * D_pad * 2 * 2           # bf16 weight blocks (double-buffered)
        per_t = tb * (2 * E2 * 4                        # f32 enc chunk, double-buffered
                      + E2 * 2                          # in-kernel bf16 copy of the chunk
                      + 2 * D_pad * 4)                  # f32 e_proj + energy intermediates
        return fixed + tc * per_t

    # Batch tiles: divisors of B_pad that are multiples of 8 (keeps the fold sublane-clean).
    tb_cands = sorted((d for d in range(8, B_pad + 1, 8) if B_pad % d == 0), reverse=True)
    if two_cores and len(tb_cands) > 1:
        tb_cands = tb_cands[1:] + tb_cands[:1]          # prefer >= 2 batch tiles on v7x

    # T chunks: multiples of 8 dividing T (8-aligned chunk stores), plus T (no chunking).
    t_cands = sorted({d for d in range(8, T + 1, 8) if T % d == 0} | {T}, reverse=True)

    for tb in tb_cands:
        for tc in t_cands:
            if footprint(tb, tc) <= budget:
                return tb, tc
    return min(tb_cands), min(t_cands)                  # best effort for very tight budgets


# ----------------------------------------------------------------------------------------
# Wrapper
# ----------------------------------------------------------------------------------------
def attention_forward(hidden, encoder_outputs, mask, attn_w, attn_b, v_w,
                      *, compute_dtype=jnp.bfloat16, vmem_budget_bytes=None):
    """
    hidden:          [B, D]        float32
    encoder_outputs: [T, B, E2]    float32 (torch seq-major layout; consumed directly)
    mask:            [B, T]        bool (True = masked)
    attn_w:          [D, E2 + D]   nn.Linear weight ([out, in]; concat order = (hidden, enc))
    attn_b:          [D]
    v_w:             [1, D]        nn.Linear weight (no bias)
    returns:         [B, T]        float32 softmax attention weights
    """
    T, B, E2 = encoder_outputs.shape
    D = hidden.shape[1]

    two_cores, vmem_limit, budget = _tpu_config()
    if vmem_budget_bytes is not None:
        budget = vmem_budget_bytes

    B_pad = _round_up(B, 8)      # batch: multiple of 8 (no sublane relayout in the fold)
    T_pad = _round_up(T, 128)    # lane dim of mask / score / output only (enc's T untouched)
    D_pad = _round_up(D, 128)    # output-feature dim of the projections (weights only)

    # Pad the batch to a multiple of 8.  Ideally the producer already supplies a padded
    # batch so these pads are no-ops; padded rows are fully masked and sliced off below.
    mask_i = mask.astype(jnp.int32)                       # 1 = torch masked_fill position
    if B_pad != B:
        hidden = jnp.pad(hidden, ((0, B_pad - B), (0, 0)))
        encoder_outputs = jnp.pad(encoder_outputs, ((0, 0), (0, B_pad - B), (0, 0)))
        mask_i = jnp.pad(mask_i, ((0, B_pad - B), (0, 0)), constant_values=1)
    if T_pad != T:
        mask_i = jnp.pad(mask_i, ((0, 0), (0, T_pad - T)), constant_values=2)   # 2 = lane pad

    # cat((hidden, enc)) @ W.T + b  ==  hidden @ Wh + enc @ We + b  (hidden owns the first D
    # input columns of the torch weight).  Zero-pad the output-feature dim to D_pad:
    # tanh(0) = 0 and v_pad = 0, so padded columns contribute nothing to the score.
    dpad = D_pad - D
    wh = jnp.pad(jnp.transpose(attn_w[:, :D]), ((0, 0), (0, dpad))).astype(compute_dtype)  # [D,  D_pad]
    we = jnp.pad(jnp.transpose(attn_w[:, D:]), ((0, 0), (0, dpad))).astype(compute_dtype)  # [E2, D_pad]
    bias = jnp.pad(attn_b, (0, dpad)).reshape(1, D_pad).astype(jnp.float32)
    v_row = jnp.pad(v_w.reshape(-1), (0, dpad)).reshape(1, D_pad).astype(jnp.float32)

    # encoder_outputs / hidden go to the kernel in their native f32 layout -- the bf16 cast
    # happens in-kernel, so the dominant tensor crosses HBM exactly once.
    # TODO(synk): if the upstream encoder already emits bf16 activations, pass them straight
    # through and drop the in-kernel cast (halves enc HBM bytes again).

    TB, TC = _choose_tiles(B_pad, T, T_pad, E2, D_pad, two_cores=two_cores, budget=budget)
    nb, nt = B_pad // TB, T // TC
    assert nb * TB == B_pad and nt * TC == T and (TC % 8 == 0 or TC == T)

    cost = pl.CostEstimate(
        flops=2 * T * B_pad * E2 * D_pad + 2 * B_pad * D * D_pad + 3 * T * B_pad * D_pad,
        transcendentals=T * B_pad * D_pad + B_pad * T_pad,
        bytes_accessed=(T * B_pad * E2 * 4 + B_pad * D * 4 + 2 * B_pad * T_pad * 4
                        + (D + E2 + 2) * D_pad * 4))

    out_padded = pl.pallas_call(
        attention_kernel,
        out_shape=jax.ShapeDtypeStruct((B_pad, T_pad), jnp.float32),
        grid_spec=pltpu.PrefetchScalarGridSpec(
            num_scalar_prefetch=0,
            grid=(nb, nt),
            in_specs=[
                pl.BlockSpec((TB, D), lambda b, t: (b, 0)),            # hidden (f32)
                pl.BlockSpec((TC, TB, E2), lambda b, t: (t, b, 0)),    # enc chunk (f32, native)
                pl.BlockSpec((TB, T_pad), lambda b, t: (b, 0)),        # mask (int32)
                pl.BlockSpec((D, D_pad), lambda b, t: (0, 0)),         # Wh (bf16, resident)
                pl.BlockSpec((E2, D_pad), lambda b, t: (0, 0)),        # We (bf16, resident)
                pl.BlockSpec((1, D_pad), lambda b, t: (0, 0)),         # bias (f32, resident)
                pl.BlockSpec((1, D_pad), lambda b, t: (0, 0)),         # v (f32, resident)
                # NOTE: the resident weight/bias/v blocks could use pipeline_mode=
                # pl.Buffered(1) to reclaim a little more VMEM on v7x; left default here.
            ],
            out_specs=pl.BlockSpec((TB, T_pad), lambda b, t: (b, 0)),  # lane-dense (T_pad%128==0)
            scratch_shapes=[
                pltpu.VMEM((TB, D_pad), jnp.float32),   # h_proj + bias (per batch tile)
                pltpu.VMEM((T_pad, TB), jnp.float32),   # raw scores, filled chunk by chunk
            ],
        ),
        compiler_params=pltpu.CompilerParams(
            dimension_semantics=("parallel", "arbitrary"),
            vmem_limit_bytes=vmem_limit),
        cost_estimate=cost,
    )(hidden, encoder_outputs, mask_i, wh, we, bias, v_row)

    return out_padded[:B, :T]


# ----------------------------------------------------------------------------------------
# Pure-JAX reference + tests
# ----------------------------------------------------------------------------------------
def attention_reference(hidden, encoder_outputs, mask, attn_w, attn_b, v_w):
    """Pure-JAX f32 mirror of the PyTorch forward (for verification)."""
    T = encoder_outputs.shape[0]
    h = jnp.repeat(hidden[:, None, :], T, axis=1)               # [B, T, D]
    enc = jnp.transpose(encoder_outputs, (1, 0, 2))             # [B, T, E2]
    cat = jnp.concatenate([h, enc], axis=2)                     # [B, T, D+E2] (hidden first)
    energy = jnp.tanh(cat @ attn_w.T + attn_b)                  # [B, T, D]
    attention = (energy @ v_w.T)[..., 0]                        # [B, T]
    attention = jnp.where(mask, NEG_FILL, attention)
    return jax.nn.softmax(attention, axis=1)


def _run_case(case_key, B, T, enc_hid_dim, dec_hid_dim, **fwd_kwargs):
    E2, D = 2 * enc_hid_dim, dec_hid_dim
    k1, k2, k3, k4, k5, k6 = jax.random.split(case_key, 6)

    hidden = jax.random.normal(k1, (B, D), dtype=jnp.float32)
    encoder_outputs = jax.random.normal(k2, (T, B, E2), dtype=jnp.float32)
    lengths = jax.random.randint(k6, (B,), 1, T + 1)                       # >=1 valid pos / row
    mask = jnp.arange(T)[None, :] >= lengths[:, None]                      # [B, T], True = pad

    attn_w = 0.1 * jax.random.normal(k3, (D, E2 + D), dtype=jnp.float32)   # attn.weight [out,in]
    attn_b = 0.1 * jax.random.normal(k4, (D,), dtype=jnp.float32)          # attn.bias
    v_w = 0.1 * jax.random.normal(k5, (1, D), dtype=jnp.float32)           # v.weight (no bias)

    out = jax.block_until_ready(
        attention_forward(hidden, encoder_outputs, mask, attn_w, attn_b, v_w, **fwd_kwargs))
    ref = attention_reference(hidden, encoder_outputs, mask, attn_w, attn_b, v_w)

    assert out.shape == (B, T)
    # bf16 MXU operands -> bf16-appropriate tolerance (outputs are probabilities in [0,1]).
    assert jnp.allclose(out, ref, atol=1e-2, rtol=5e-2), f"mismatch vs reference (B={B}, T={T})"
    assert jnp.allclose(jnp.sum(out, axis=1), jnp.ones((B,)), atol=1e-4)


if __name__ == "__main__":
    root = jax.random.PRNGKey(0)
    # 1) ragged tiny batch: exercises B->8 padding, T->128 lane padding, D->128 padding, nt=1.
    _run_case(jax.random.fold_in(root, 0), B=2, T=8, enc_hid_dim=16, dec_hid_dim=32)
    # 2) multiple-of-8 batch: single fat batch tile (1-TC chips) / 2 tiles (v7x), no T chunking.
    _run_case(jax.random.fold_in(root, 1), B=16, T=24, enc_hid_dim=16, dec_hid_dim=32)
    # 3) artificially tiny VMEM budget to exercise BOTH grid axes: multiple batch tiles and
    #    multiple T chunks through the score scratch / chunked-MXU path.
    _run_case(jax.random.fold_in(root, 2), B=16, T=48, enc_hid_dim=16, dec_hid_dim=64,
              vmem_budget_bytes=250_000)
    print("KERNEL_OK")
</pallas_src>

<mosaic_0001>
module attributes {stable_mosaic.version = 11 : i64} {
  func.func @attention_kernel(%arg0: i32, %arg1: i32, %arg2: memref<8x32xf32, #tpu.memory_space<vmem>>, %arg3: memref<8x8x32xf32, #tpu.memory_space<vmem>>, %arg4: memref<8x128xi32, #tpu.memory_space<vmem>>, %arg5: memref<32x128xbf16, #tpu.memory_space<vmem>>, %arg6: memref<32x128xbf16, #tpu.memory_space<vmem>>, %arg7: memref<1x128xf32, #tpu.memory_space<vmem>>, %arg8: memref<1x128xf32, #tpu.memory_space<vmem>>, %arg9: memref<8x128xf32, #tpu.memory_space<vmem>>, %arg10: memref<8x128xf32, #tpu.memory_space<vmem>>, %arg11: memref<128x8xf32, #tpu.memory_space<vmem>>) attributes {dimension_semantics = [#tpu.dimension_semantics<parallel>, #tpu.dimension_semantics<arbitrary>], iteration_bounds = array<i64: 1, 1>, scalar_prefetch = 0 : i64, scratch_operands = 2 : i64, tpu.core_type = #tpu.core_type<tc>, window_params = [{transform_indices = @transform_0, window_bounds = array<i64: 8, 32>}, {transform_indices = @transform_1, window_bounds = array<i64: 8, 8, 32>}, {transform_indices = @transform_2, window_bounds = array<i64: 8, 128>}, {pipeline_mode = #tpu.pipeline_mode<synchronous>, transform_indices = @transform_3, window_bounds = array<i64: 32, 128>}, {pipeline_mode = #tpu.pipeline_mode<synchronous>, transform_indices = @transform_4, window_bounds = array<i64: 32, 128>}, {pipeline_mode = #tpu.pipeline_mode<synchronous>, transform_indices = @transform_5, window_bounds = array<i64: 1, 128>}, {pipeline_mode = #tpu.pipeline_mode<synchronous>, transform_indices = @transform_6, window_bounds = array<i64: 1, 128>}, {transform_indices = @transform_7, window_bounds = array<i64: 8, 128>}]} {
    %c0_i32 = arith.constant 0 : i32
    %0 = arith.cmpi eq, %arg1, %c0_i32 : i32
    %1 = arith.extui %0 : i1 to i32
    %c0_i32_0 = arith.constant 0 : i32
    %2 = arith.cmpi ne, %1, %c0_i32_0 : i32
    scf.if %2 {
      %c0_13 = arith.constant 0 : index
      %c0_14 = arith.constant 0 : index
      %26 = vector.load %arg2[%c0_13, %c0_14] : memref<8x32xf32, #tpu.memory_space<vmem>>, vector<8x32xf32>
      %27 = arith.truncf %26 : vector<8x32xf32> to vector<8x32xbf16>
      %c0_15 = arith.constant 0 : index
      %c0_16 = arith.constant 0 : index
      %28 = vector.load %arg5[%c0_15, %c0_16] : memref<32x128xbf16, #tpu.memory_space<vmem>>, vector<32x128xbf16>
      %cst_17 = arith.constant dense<0.000000e+00> : vector<8x128xf32>
      %29 = tpu.matmul %27, %28, %cst_17 {dimension_numbers = #tpu.dot_dimension_numbers<[1], [0], [0], [1], [0, 0, 1, 1], [], []>} : vector<8x32xbf16>, vector<32x128xbf16>, vector<8x128xf32> -> vector<8x128xf32>
      %c0_18 = arith.constant 0 : index
      %c0_19 = arith.constant 0 : index
      %30 = vector.load %arg7[%c0_18, %c0_19] : memref<1x128xf32, #tpu.memory_space<vmem>>, vector<1x128xf32>
      %31 = vector.broadcast %30 : vector<1x128xf32> to vector<8x128xf32>
      %32 = arith.addf %29, %31 : vector<8x128xf32>
      %c0_20 = arith.constant 0 : index
      %c0_21 = arith.constant 0 : index
      %33 = vector.load %arg10[%c0_20, %c0_21] : memref<8x128xf32, #tpu.memory_space<vmem>>, vector<8x128xf32>
      tpu.vector_store %arg10[%c0_20, %c0_21], %32 {strides = array<i32>} : memref<8x128xf32, #tpu.memory_space<vmem>>, vector<8x128xf32>,
    } else {
    }
    %c0 = arith.constant 0 : index
    %c0_1 = arith.constant 0 : index
    %c0_2 = arith.constant 0 : index
    %3 = vector.load %arg3[%c0, %c0_1, %c0_2] : memref<8x8x32xf32, #tpu.memory_space<vmem>>, vector<8x8x32xf32>
    %4 = vector.shape_cast %3 : vector<8x8x32xf32> to vector<64x32xf32>
    %5 = arith.truncf %4 : vector<64x32xf32> to vector<64x32xbf16>
    %c0_3 = arith.constant 0 : index
    %c0_4 = arith.constant 0 : index
    %6 = vector.load %arg6[%c0_3, %c0_4] : memref<32x128xbf16, #tpu.memory_space<vmem>>, vector<32x128xbf16>
    %cst = arith.constant dense<0.000000e+00> : vector<64x128xf32>
    %7 = tpu.matmul %5, %6, %cst {dimension_numbers = #tpu.dot_dimension_numbers<[1], [0], [0], [1], [0, 0, 1, 1], [], []>} : vector<64x32xbf16>, vector<32x128xbf16>, vector<64x128xf32> -> vector<64x128xf32>
    %8 = vector.shape_cast %7 : vector<64x128xf32> to vector<8x8x128xf32>
    %c0_5 = arith.constant 0 : index
    %c0_6 = arith.constant 0 : index
    %9 = vector.load %arg10[%c0_5, %c0_6] : memref<8x128xf32, #tpu.memory_space<vmem>>, vector<8x128xf32>
    %10 = vector.shape_cast %9 : vector<8x128xf32> to vector<1x8x128xf32>
    %11 = vector.broadcast %10 : vector<1x8x128xf32> to vector<8x8x128xf32>
    %12 = arith.addf %8, %11 : vector<8x8x128xf32>
    %13 = math.tanh %12 : vector<8x8x128xf32>
    %c0_7 = arith.constant 0 : index
    %c0_8 = arith.constant 0 : index
    %14 = vector.load %arg8[%c0_7, %c0_8] : memref<1x128xf32, #tpu.memory_space<vmem>>, vector<1x128xf32>
    %15 = vector.shape_cast %14 : vector<1x128xf32> to vector<1x1x128xf32>
    %16 = vector.broadcast %15 : vector<1x1x128xf32> to vector<8x8x128xf32>
    %17 = arith.mulf %13, %16 : vector<8x8x128xf32>
    %cst_9 = arith.constant dense<0.000000e+00> : vector<8x8xf32>
    %18 = vector.multi_reduction <add>, %17, %cst_9 [2] : vector<8x8x128xf32> to vector<8x8xf32>
    %c8_i32 = arith.constant 8 : i32
    %19 = arith.muli %arg1, %c8_i32 : i32
    %20 = tpu.assume_multiple %19, 8 : i32
    %21 = arith.index_cast %20 : i32 to index
    %c0_10 = arith.constant 0 : index
    %22 = vector.load %arg11[%21, %c0_10] : memref<128x8xf32, #tpu.memory_space<vmem>>, vector<8x8xf32>
    tpu.vector_store %arg11[%21, %c0_10], %18 {strides = array<i32>} : memref<128x8xf32, #tpu.memory_space<vmem>>, vector<8x8xf32>,
    %c0_i32_11 = arith.constant 0 : i32
    %23 = arith.cmpi eq, %arg1, %c0_i32_11 : i32
    %24 = arith.extui %23 : i1 to i32
    %c0_i32_12 = arith.constant 0 : i32
    %25 = arith.cmpi ne, %24, %c0_i32_12 : i32
    scf.if %25 {
      %c0_13 = arith.constant 0 : index
      %c0_14 = arith.constant 0 : index
      %26 = vector.load %arg11[%c0_13, %c0_14] : memref<128x8xf32, #tpu.memory_space<vmem>>, vector<128x8xf32>
      %27 = tpu.transpose %26, [1, 0] : vector<128x8xf32> -> vector<8x128xf32>
      %c0_15 = arith.constant 0 : index
      %c0_16 = arith.constant 0 : index
      %28 = vector.load %arg4[%c0_15, %c0_16] : memref<8x128xi32, #tpu.memory_space<vmem>>, vector<8x128xi32>
      %c1_i32 = arith.constant 1 : i32
      %29 = vector.broadcast %c1_i32 : i32 to vector<8x128xi32>
      %30 = arith.cmpi eq, %28, %29 : vector<8x128xi32>
      %cst_17 = arith.constant -1.000000e+10 : f32
      %31 = vector.broadcast %cst_17 : f32 to vector<8x128xf32>
      %32 = arith.select %30, %31, %27 : vector<8x128xi1>, vector<8x128xf32>
      %c2_i32 = arith.constant 2 : i32
      %33 = vector.broadcast %c2_i32 : i32 to vector<8x128xi32>
      %34 = arith.cmpi sge, %28, %33 : vector<8x128xi32>
      %cst_18 = arith.constant 0xFF800000 : f32
      %35 = vector.broadcast %cst_18 : f32 to vector<8x128xf32>
      %36 = arith.select %34, %35, %32 : vector<8x128xi1>, vector<8x128xf32>
      %cst_19 = arith.constant dense<0xFF800000> : vector<8xf32>
      %37 = vector.multi_reduction <maximumf>, %36, %cst_19 [1] : vector<8x128xf32> to vector<8xf32>
      %38 = vector.shape_cast %37 : vector<8xf32> to vector<8x1xf32>
      %39 = vector.broadcast %38 : vector<8x1xf32> to vector<8x128xf32>
      %40 = arith.subf %36, %39 : vector<8x128xf32>
      %41 = math.exp %40 : vector<8x128xf32>
      %cst_20 = arith.constant dense<0.000000e+00> : vector<8xf32>
      %42 = vector.multi_reduction <add>, %41, %cst_20 [1] : vector<8x128xf32> to vector<8xf32>
      %43 = vector.shape_cast %42 : vector<8xf32> to vector<8x1xf32>
      %44 = vector.broadcast %43 : vector<8x1xf32> to vector<8x128xf32>
      %45 = arith.divf %41, %44 : vector<8x128xf32>
      %c0_21 = arith.constant 0 : index
      %c0_22 = arith.constant 0 : index
      %46 = vector.load %arg9[%c0_21, %c0_22] : memref<8x128xf32, #tpu.memory_space<vmem>>, vector<8x128xf32>
      tpu.vector_store %arg9[%c0_21, %c0_22], %45 {strides = array<i32>} : memref<8x128xf32, #tpu.memory_space<vmem>>, vector<8x128xf32>,
    } else {
    }
    return
  }
  func.func @transform_0(%arg0: i32, %arg1: i32) -> (i32, i32) {
    %c0_i32 = arith.constant 0 : i32
    %c0_i32_0 = arith.constant 0 : i32
    return %arg0, %c0_i32 : i32, i32
  }
  func.func @transform_1(%arg0: i32, %arg1: i32) -> (i32, i32, i32) {
    %c0_i32 = arith.constant 0 : i32
    %c0_i32_0 = arith.constant 0 : i32
    return %arg1, %arg0, %c0_i32 : i32, i32, i32
  }
  func.func @transform_2(%arg0: i32, %arg1: i32) -> (i32, i32) {
    %c0_i32 = arith.constant 0 : i32
    %c0_i32_0 = arith.constant 0 : i32
    return %arg0, %c0_i32 : i32, i32
  }
  func.func @transform_3(%arg0: i32, %arg1: i32) -> (i32, i32) {
    %c0_i32 = arith.constant 0 : i32
    %c0_i32_0 = arith.constant 0 : i32
    %c0_i32_1 = arith.constant 0 : i32
    return %c0_i32, %c0_i32_0 : i32, i32
  }
  func.func @transform_4(%arg0: i32, %arg1: i32) -> (i32, i32) {
    %c0_i32 = arith.constant 0 : i32
    %c0_i32_0 = arith.constant 0 : i32
    %c0_i32_1 = arith.constant 0 : i32
    return %c0_i32, %c0_i32_0 : i32, i32
  }
  func.func @transform_5(%arg0: i32, %arg1: i32) -> (i32, i32) {
    %c0_i32 = arith.constant 0 : i32
    %c0_i32_0 = arith.constant 0 : i32
    %c0_i32_1 = arith.constant 0 : i32
    return %c0_i32, %c0_i32_0 : i32, i32
  }
  func.func @transform_6(%arg0: i32, %arg1: i32) -> (i32, i32) {
    %c0_i32 = arith.constant 0 : i32
    %c0_i32_0 = arith.constant 0 : i32
    %c0_i32_1 = arith.constant 0 : i32
    return %c0_i32, %c0_i32_0 : i32, i32
  }
  func.func @transform_7(%arg0: i32, %arg1: i32) -> (i32, i32) {
    %c0_i32 = arith.constant 0 : i32
    %c0_i32_0 = arith.constant 0 : i32
    return %arg0, %c0_i32 : i32, i32
  }
}

</mosaic_0001>

<llo_original>
// kernel: tpu_custom_call.1
$region0: #{tpu_custom_call.1}
  #allocation0 [shape = 'u32[]', space=smem, size = 0x4, offset = 0x4, fixed_abs, tag = 'smem constant byte address 0x4 - core index']
  #allocation1 [shape = 'u32[144,128]{1,0:T(1,128)}', space=vmem, size = 0x12000, scoped, tag = 'internal scratch']
  #allocation2 [shape = 'f32[8,128]{1,0:T(8,128)}', space=vmem, size = 0x1000, scoped, tag = 'scratch operand']
  #allocation3 [shape = 'f32[128,8]{1,0:T(8,128)}', space=vmem, size = 0x10000, scoped, tag = 'scratch operand']
  %s0 = inlined_call_operand.hbm [shape: f32[8,32], index: 0, kind: input, shape index: {}]
  %s1 = inlined_call_operand.hbm [shape: f32[8,8,32], index: 1, kind: input, shape index: {}]
  %s2 = inlined_call_operand.hbm [shape: s32[8,128], index: 2, kind: input, shape index: {}]
  %s3 = inlined_call_operand.hbm [shape: bf16[32,128], index: 3, kind: input, shape index: {}]
  %s4 = inlined_call_operand.hbm [shape: bf16[32,128], index: 4, kind: input, shape index: {}]
  %s5 = inlined_call_operand.vmem [shape: f32[1,128], index: 5, kind: input, shape index: {}]
  %s6 = inlined_call_operand.vmem [shape: f32[1,128], index: 6, kind: input, shape index: {}]
  %s7 = inlined_call_operand.hbm [shape: f32[8,128], index: 7, kind: output, shape index: {}]
  %s8 = sld [smem:[#allocation0]]
  $region66: #{tpu_custom_call.1} parent=0
    _
  %s10 = ssub.s32 1, %s8
  %s11 = scalar_select 0, %s10, %s8
  $region1: #{tpu_custom_call.1} parent=0
    #allocation4 [shape = 'u8[4096]{0}', space=vmem, size = 0x1000, scoped, tag = 'input window, operand 0, single buffered']
    #allocation5 [shape = 's32[1]{0}', space=sflag, size = 0x4, scoped, tag = 'scoped memory for tpu_custom_call.1']
    #allocation6 [shape = 's32[1]{0}', space=sflag, size = 0x4, scoped, tag = 'scoped memory for tpu_custom_call.1']
    #allocation7 [shape = 'u8[32768]{0}', space=vmem, size = 0x8000, scoped, tag = 'input window, operand 1, single buffered']
    #allocation8 [shape = 's32[1]{0}', space=sflag, size = 0x4, scoped, tag = 'scoped memory for tpu_custom_call.1']
    #allocation9 [shape = 'u8[4096]{0}', space=vmem, size = 0x1000, scoped, tag = 'input window, operand 2, single buffered']
    #allocation10 [shape = 'u8[8192]{0}', space=vmem, size = 0x2000, scoped, tag = 'input window, operand 3, single buffered']
    #allocation11 [shape = 's32[1]{0}', space=sflag, size = 0x4, scoped, tag = 'scoped memory for tpu_custom_call.1']
    #allocation12 [shape = 'u8[8192]{0}', space=vmem, size = 0x2000, scoped, tag = 'input window, operand 4, single buffered']
    #allocation13 [shape = 'u8[4096]{0}', space=vmem, size = 0x1000, scoped, tag = 'output window, operand 0, single buffered']
    %12 = vsyncpa [#allocation5], 0
    %13 = vsyncpa [#allocation8], 0
    %14 = vsyncpa [#allocation11], 0
    %15 = vsyncpa [#allocation6], 0
    // Predicated region
    $region2: #{tpu_custom_call.1} parent=1 // pred_check
      _
    $region3: #{tpu_custom_call.1} parent=1 // pred_check_branch
      %17 = sbr.rel (0) target = $region5
    $region4: #{tpu_custom_call.1} parent=1 // pred_region
      %s19 = ssub.s32 128, 128
      %20 = vsyncadd [#allocation5], %s19
      %s22 = sshll.u32 [#allocation4], 4
      %s23 = int_to_ptr.vmem [resolvable:$true] %s22
      %25 = dma.hbm_to_vmem [thread:$0]  %s0, 128, %s23, [#allocation5]
    $region5: #{tpu_custom_call.1} parent=1 // pred_fallthru
      _
    // Predicated region
    $region6: #{tpu_custom_call.1} parent=1 // pred_check
      _
    $region7: #{tpu_custom_call.1} parent=1 // pred_check_branch
      %27 = sbr.rel (0) target = $region9
    $region8: #{tpu_custom_call.1} parent=1 // pred_region
      %s29 = ssub.s32 1024, 1024
      %30 = vsyncadd [#allocation8], %s29
      %s31 = sshll.u32 [#allocation7], 4
      %s32 = int_to_ptr.vmem [resolvable:$true] %s31
      %37 = dma.hbm_to_vmem [thread:$0]  %s1, 1024, %s32, [#allocation8], 128, 128, 8
    $region9: #{tpu_custom_call.1} parent=1 // pred_fallthru
      _
    // Predicated region
    $region10: #{tpu_custom_call.1} parent=1 // pred_check
      _
    $region11: #{tpu_custom_call.1} parent=1 // pred_check_branch
      %39 = sbr.rel (0) target = $region13
    $region12: #{tpu_custom_call.1} parent=1 // pred_region
      %s41 = ssub.s32 128, 128
      %42 = vsyncadd [#allocation8], %s41
      %s44 = sshll.u32 [#allocation9], 4
      %s45 = int_to_ptr.vmem [resolvable:$true] %s44
      %47 = dma.hbm_to_vmem [thread:$0]  %s2, 128, %s45, [#allocation8]
    $region13: #{tpu_custom_call.1} parent=1 // pred_fallthru
      _
    // Predicated region
    $region14: #{tpu_custom_call.1} parent=1 // pred_check
      _
    $region15: #{tpu_custom_call.1} parent=1 // pred_check_branch
      %49 = sbr.rel (0) target = $region17
    $region16: #{tpu_custom_call.1} parent=1 // pred_region
      %s51 = ssub.s32 256, 256
      %52 = vsyncadd [#allocation11], %s51
      %s53 = sshll.u32 [#allocation10], 4
      %s54 = int_to_ptr.vmem [resolvable:$true] %s53
      %59 = dma.hbm_to_vmem [thread:$0]  %s3, 256, %s54, [#allocation11], 64, 64, 4
    $region17: #{tpu_custom_call.1} parent=1 // pred_fallthru
      _
    // Predicated region
    $region18: #{tpu_custom_call.1} parent=1 // pred_check
      _
    $region19: #{tpu_custom_call.1} parent=1 // pred_check_branch
      %61 = sbr.rel (0) target = $region21
    $region20: #{tpu_custom_call.1} parent=1 // pred_region
      %s63 = ssub.s32 256, 256
      %64 = vsyncadd [#allocation11], %s63
      %s65 = sshll.u32 [#allocation12], 4
      %s66 = int_to_ptr.vmem [resolvable:$true] %s65
      %71 = dma.hbm_to_vmem [thread:$0]  %s4, 256, %s66, [#allocation11], 64, 64, 4
    $region21: #{tpu_custom_call.1} parent=1 // pred_fallthru
      _
    // Predicated region
    $region22: #{tpu_custom_call.1} parent=1 // pred_check
      _
    $region23: #{tpu_custom_call.1} parent=1 // pred_check_branch
      %73 = sbr.rel (0) target = $region25
    $region24: #{tpu_custom_call.1} parent=1 // pred_region
      _
    $region25: #{tpu_custom_call.1} parent=1 // pred_fallthru
      _
    // Predicated region
    $region26: #{tpu_custom_call.1} parent=1 // pred_check
      _
    $region27: #{tpu_custom_call.1} parent=1 // pred_check_branch
      %75 = sbr.rel (0) target = $region29
    $region28: #{tpu_custom_call.1} parent=1 // pred_region
      _
    $region29: #{tpu_custom_call.1} parent=1 // pred_fallthru
      _
    // Predicated region
    $region30: #{tpu_custom_call.1} parent=1 // pred_check
      _
    $region31: #{tpu_custom_call.1} parent=1 // pred_check_branch
      %77 = sbr.rel (0) target = $region33
    $region32: #{tpu_custom_call.1} parent=1 // pred_region
      %78 = dma.done [#allocation5], 128
    $region33: #{tpu_custom_call.1} parent=1 // pred_fallthru
      _
    // Predicated region
    $region34: #{tpu_custom_call.1} parent=1 // pred_check
      _
    $region35: #{tpu_custom_call.1} parent=1 // pred_check_branch
      %80 = sbr.rel (0) target = $region37
    $region36: #{tpu_custom_call.1} parent=1 // pred_region
      %81 = dma.done [#allocation8], 1024
    $region37: #{tpu_custom_call.1} parent=1 // pred_fallthru
      _
    // Predicated region
    $region38: #{tpu_custom_call.1} parent=1 // pred_check
      _
    $region39: #{tpu_custom_call.1} parent=1 // pred_check_branch
      %83 = sbr.rel (0) target = $region41
    $region40: #{tpu_custom_call.1} parent=1 // pred_region
      %84 = dma.done [#allocation8], 128
    $region41: #{tpu_custom_call.1} parent=1 // pred_fallthru
      _
    // Predicated region
    $region42: #{tpu_custom_call.1} parent=1 // pred_check
      _
    $region43: #{tpu_custom_call.1} parent=1 // pred_check_branch
      %86 = sbr.rel (0) target = $region45
    $region44: #{tpu_custom_call.1} parent=1 // pred_region
      %87 = dma.done [#allocation11], 256
    $region45: #{tpu_custom_call.1} parent=1 // pred_fallthru
      _
    // Predicated region
    $region46: #{tpu_custom_call.1} parent=1 // pred_check
      _
    $region47: #{tpu_custom_call.1} parent=1 // pred_check_branch
      %89 = sbr.rel (0) target = $region49
    $region48: #{tpu_custom_call.1} parent=1 // pred_region
      %90 = dma.done [#allocation11], 256
    $region49: #{tpu_custom_call.1} parent=1 // pred_fallthru
      _
    %p92 = scmp.eq.s32.totalorder 0, 0
    // Predicated region
    $region50: #{tpu_custom_call.1} parent=1 // pred_check
      %p93 = pneg %p92
    $region51: #{tpu_custom_call.1} parent=1 // pred_check_branch
      %95 = sbr.rel (%p93) target = $region53
    $region52: #{tpu_custom_call.1} parent=1 // pred_region
      %v96 = vld [vmem:[#allocation4] sm:$0xff]
      %v97 = vpack.c.bf16 %v96, %v96
      %v98 = vld [vmem:[#allocation10] sm:$0xf]
      %v99 = vld [vmem:[#allocation10 + $0x4] sm:$0xf]
      %v100 = vld [vmem:[#allocation10 + $0x8] sm:$0xf]
      %v101 = vld [vmem:[#allocation10 + $0xc] sm:$0xf]
      %v102 = vld [vmem:[%s5] sm:$0x1]
      %v104 = vlaneseq
      %v105 = vshrl.u32 %v104, 7
      %v106 = vsub.s32 0, %v105
      %v107 = vrot.slane %v102, %v106
      %v113 = vunpack.c.l.b16 %v98
      %v114 = vunpack.c.l.b16 %v99
      %v115 = vunpack.c.l.b16 %v100
      %v116 = vunpack.c.l.b16 %v101
      %v117 = vpack.c.b16 %v114, %v113
      %v118 = vpack.c.b16 %v116, %v115
      %vm121 = vcmask 261120
      %v123 = vsel %vm121, %v97, 0
      %125 = vmatprep.subr.bf16.mxu0 0
      %126 = vmatpush1.bf16.msra.mxu0 0
      %127 = vmatprep.subr.bf16.mxu0 0
      %128 = vmatpush1.bf16.msra.mxu0 0
      %129 = vmatprep.subr.bf16.mxu0 0
      %130 = vmatpush1.bf16.msra.mxu0 0
      %131 = vmatprep.subr.bf16.mxu0 0
      %132 = vmatpush1.bf16.msra.mxu0 0
      %133 = vmatprep.subr.bf16.mxu0 0
      %134 = vmatpush1.bf16.msra.mxu0 0
      %135 = vmatprep.subr.bf16.mxu0 0
      %136 = vmatpush1.bf16.msra.mxu0 0
      %137 = vmatprep.subr.bf16.mxu0 0
      %138 = vmatpush1.bf16.msra.mxu0 %v118
      %139 = vmatprep.subr.bf16.mxu0 0
      %140 = vmatpush1.bf16.msra.mxu0 %v117
      %141 = vmatprep.subr.bf16.mxu0 0
      %142 = vmatpush2.bf16.msra.mxu0 0
      %143 = vmatprep.subr.bf16.mxu0 0
      %144 = vmatpush2.bf16.msra.mxu0 0
      %145 = vmatprep.subr.bf16.mxu0 0
      %146 = vmatpush2.bf16.msra.mxu0 0
      %147 = vmatprep.subr.bf16.mxu0 0
      %148 = vmatpush2.bf16.msra.mxu0 0
      %149 = vmatprep.subr.bf16.mxu0 0
      %150 = vmatpush2.bf16.msra.mxu0 0
      %151 = vmatprep.subr.bf16.mxu0 0
      %152 = vmatpush2.bf16.msra.mxu0 0
      %153 = vmatprep.subr.bf16.mxu0 0
      %154 = vmatpush2.bf16.msra.mxu0 0
      %155 = vmatprep.subr.bf16.mxu0 0
      %156 = vmatpush2.bf16.msra.mxu0 0
      %157 = vmatprep.mubr.bf16.mxu0 0
      %158 = vmatmul.mubr.bf16.gmra.mxu0 %v123
      %v159 = vpop.f32.mrf.mxu0
      %v160 = vadd.f32 %v107, %v159
      %v161 = vpop.f32.mrf.mxu0
      %v162 = vpop.f32.mrf.mxu0
      %v163 = vpop.f32.mrf.mxu0
      %164 = vdwg.mxu0
      %165 = vst [vmem:[#allocation2] sm:$0xff] %v160
    $region53: #{tpu_custom_call.1} parent=1 // pred_fallthru
      _
    %v166 = vld [vmem:[#allocation7] sm:$0xff]
    %v167 = vld [vmem:[#allocation7 + $0x8] sm:$0xff]
    %v168 = vld [vmem:[#allocation7 + $0x10] sm:$0xff]
    %v169 = vld [vmem:[#allocation7 + $0x18] sm:$0xff]
    %v170 = vld [vmem:[#allocation7 + $0x20] sm:$0xff]
    %v171 = vld [vmem:[#allocation7 + $0x28] sm:$0xff]
    %v172 = vld [vmem:[#allocation7 + $0x30] sm:$0xff]
    %v173 = vld [vmem:[#allocation7 + $0x38] sm:$0xff]
    %v174 = vpack.c.bf16 %v167, %v166
    %v175 = vpack.c.bf16 %v169, %v168
    %v176 = vpack.c.bf16 %v171, %v170
    %v177 = vpack.c.bf16 %v173, %v172
    %v178 = vld [vmem:[#allocation12] sm:$0xf]
    %v179 = vld [vmem:[#allocation12 + $0x4] sm:$0xf]
    %v180 = vld [vmem:[#allocation12 + $0x8] sm:$0xf]
    %v181 = vld [vmem:[#allocation12 + $0xc] sm:$0xf]
    %v186 = vunpack.c.l.b16 %v178
    %v187 = vunpack.c.l.b16 %v179
    %v188 = vunpack.c.l.b16 %v180
    %v189 = vunpack.c.l.b16 %v181
    %v190 = vpack.c.b16 %v187, %v186
    %v191 = vpack.c.b16 %v189, %v188
    %vm194 = vcmask 261120
    %v196 = vsel %vm194, %v174, 0
    %v199 = vsel %vm194, %v175, 0
    %v202 = vsel %vm194, %v176, 0
    %v205 = vsel %vm194, %v177, 0
    %207 = vmatprep.subr.bf16.mxu0 0
    %208 = vmatpush1.bf16.msra.mxu0 0
    %209 = vmatprep.subr.bf16.mxu0 0
    %210 = vmatpush1.bf16.msra.mxu0 0
    %211 = vmatprep.subr.bf16.mxu0 0
    %212 = vmatpush1.bf16.msra.mxu0 0
    %213 = vmatprep.subr.bf16.mxu0 0
    %214 = vmatpush1.bf16.msra.mxu0 0
    %215 = vmatprep.subr.bf16.mxu0 0
    %216 = vmatpush1.bf16.msra.mxu0 0
    %217 = vmatprep.subr.bf16.mxu0 0
    %218 = vmatpush1.bf16.msra.mxu0 0
    %219 = vmatprep.subr.bf16.mxu0 0
    %220 = vmatpush1.bf16.msra.mxu0 %v191
    %221 = vmatprep.subr.bf16.mxu0 0
    %222 = vmatpush1.bf16.msra.mxu0 %v190
    %223 = vmatprep.subr.bf16.mxu0 0
    %224 = vmatpush2.bf16.msra.mxu0 0
    %225 = vmatprep.subr.bf16.mxu0 0
    %226 = vmatpush2.bf16.msra.mxu0 0
    %227 = vmatprep.subr.bf16.mxu0 0
    %228 = vmatpush2.bf16.msra.mxu0 0
    %229 = vmatprep.subr.bf16.mxu0 0
    %230 = vmatpush2.bf16.msra.mxu0 0
    %231 = vmatprep.subr.bf16.mxu0 0
    %232 = vmatpush2.bf16.msra.mxu0 0
    %233 = vmatprep.subr.bf16.mxu0 0
    %234 = vmatpush2.bf16.msra.mxu0 0
    %235 = vmatprep.subr.bf16.mxu0 0
    %236 = vmatpush2.bf16.msra.mxu0 0
    %237 = vmatprep.subr.bf16.mxu0 0
    %238 = vmatpush2.bf16.msra.mxu0 0
    %239 = vmatprep.mubr.bf16.mxu0 0
    %240 = vmatmul.mubr.bf16.gmra.mxu0 %v196
    %v241 = vpop.f32.mrf.mxu0
    %v242 = vadd.f32 0.0, %v241
    %v243 = vpop.f32.mrf.mxu0
    %v244 = vpop.f32.mrf.mxu0
    %v245 = vadd.f32 0.0, %v244
    %v246 = vpop.f32.mrf.mxu0
    %247 = vmatprep.mubr.bf16.mxu0 0
    %248 = vmatmul.mubr.bf16.gmra.mxu0 %v199
    %v249 = vpop.f32.mrf.mxu0
    %v250 = vadd.f32 0.0, %v249
    %v251 = vpop.f32.mrf.mxu0
    %v252 = vpop.f32.mrf.mxu0
    %v253 = vadd.f32 0.0, %v252
    %v254 = vpop.f32.mrf.mxu0
    %255 = vmatprep.mubr.bf16.mxu0 0
    %256 = vmatmul.mubr.bf16.gmra.mxu0 %v202
    %v257 = vpop.f32.mrf.mxu0
    %v258 = vadd.f32 0.0, %v257
    %v259 = vpop.f32.mrf.mxu0
    %v260 = vpop.f32.mrf.mxu0
    %v261 = vadd.f32 0.0, %v260
    %v262 = vpop.f32.mrf.mxu0
    %263 = vmatprep.mubr.bf16.mxu0 0
    %264 = vmatmul.mubr.bf16.gmra.mxu0 %v205
    %v265 = vpop.f32.mrf.mxu0
    %v266 = vadd.f32 0.0, %v265
    %v267 = vpop.f32.mrf.mxu0
    %v268 = vpop.f32.mrf.mxu0
    %v269 = vadd.f32 0.0, %v268
    %v270 = vpop.f32.mrf.mxu0
    %271 = vdwg.mxu0
    %v272 = vld [vmem:[#allocation2] sm:$0xff]
    %v273 = vadd.f32 %v242, %v272
    %v274 = vadd.f32 %v245, %v272
    %v275 = vadd.f32 %v250, %v272
    %v276 = vadd.f32 %v253, %v272
    %v277 = vadd.f32 %v258, %v272
    %v278 = vadd.f32 %v261, %v272
    %v279 = vadd.f32 %v266, %v272
    %v280 = vadd.f32 %v269, %v272
    %v281 = vtanh.pop %v273
    %v282 = vtanh.pop %v274
    %v283 = vtanh.pop %v275
    %v284 = vtanh.pop %v276
    %v285 = vtanh.pop %v277
    %v286 = vtanh.pop %v278
    %v287 = vtanh.pop %v279
    %v288 = vtanh.pop %v280
    %v289 = vld [vmem:[%s6] sm:$0x1]
    %v291 = vlaneseq
    %v292 = vshrl.u32 %v291, 7
    %v293 = vsub.s32 0, %v292
    %v294 = vrot.slane %v289, %v293
    %v296 = vmul.f32 %v281, %v294
    %v297 = vmul.f32 %v282, %v294
    %v298 = vmul.f32 %v283, %v294
    %v299 = vmul.f32 %v284, %v294
    %v300 = vmul.f32 %v285, %v294
    %v301 = vmul.f32 %v286, %v294
    %v302 = vmul.f32 %v287, %v294
    %v303 = vmul.f32 %v288, %v294
    %304 = vadd.xlane.f32.xlu0 %v296
    %v305 = vpop.xlane.xlu0 %304
    %306 = vadd.xlane.f32.xlu0 %v297
    %v307 = vpop.xlane.xlu0 %306
    %308 = vadd.xlane.f32.xlu0 %v298
    %v309 = vpop.xlane.xlu0 %308
    %310 = vadd.xlane.f32.xlu0 %v299
    %v311 = vpop.xlane.xlu0 %310
    %312 = vadd.xlane.f32.xlu0 %v300
    %v313 = vpop.xlane.xlu0 %312
    %314 = vadd.xlane.f32.xlu0 %v301
    %v315 = vpop.xlane.xlu0 %314
    %316 = vadd.xlane.f32.xlu0 %v302
    %v317 = vpop.xlane.xlu0 %316
    %318 = vadd.xlane.f32.xlu0 %v303
    %v319 = vpop.xlane.xlu0 %318
    %s320 = smul.u32 0, 8
    %v329 = vlaneseq
    %v330 = vand.u32 %v329, 127
    %v331 = vlaneseq
    %v332 = vshrl.u32 %v331, 7
    %v333 = vsub.s32 %v330, %v332
    %v334 = vrot.slane %v305, %v333
    %v335 = vlaneseq
    %v336 = vshrl.u32 %v335, 7
    %v337 = vsub.s32 %v330, %v336
    %v338 = vrot.slane %v307, %v337
    %v339 = vlaneseq
    %v340 = vshrl.u32 %v339, 7
    %v341 = vsub.s32 %v330, %v340
    %v342 = vrot.slane %v309, %v341
    %v343 = vlaneseq
    %v344 = vshrl.u32 %v343, 7
    %v345 = vsub.s32 %v330, %v344
    %v346 = vrot.slane %v311, %v345
    %v347 = vlaneseq
    %v348 = vshrl.u32 %v347, 7
    %v349 = vsub.s32 %v330, %v348
    %v350 = vrot.slane %v313, %v349
    %v351 = vlaneseq
    %v352 = vshrl.u32 %v351, 7
    %v353 = vsub.s32 %v330, %v352
    %v354 = vrot.slane %v315, %v353
    %v355 = vlaneseq
    %v356 = vshrl.u32 %v355, 7
    %v357 = vsub.s32 %v330, %v356
    %v358 = vrot.slane %v317, %v357
    %v359 = vlaneseq
    %v360 = vshrl.u32 %v359, 7
    %v361 = vsub.s32 %v330, %v360
    %v362 = vrot.slane %v319, %v361
    %vm363 = vcmask 1041409
    %v364 = vsel %vm363, %v338, %v334
    %vm365 = vcmask 1042434
    %v366 = vsel %vm365, %v342, %v364
    %vm367 = vcmask 1043459
    %v368 = vsel %vm367, %v346, %v366
    %vm369 = vcmask 1044484
    %v370 = vsel %vm369, %v350, %v368
    %vm371 = vcmask 1045509
    %v372 = vsel %vm371, %v354, %v370
    %vm373 = vcmask 1046534
    %v374 = vsel %vm373, %v358, %v372
    %vm375 = vcmask 1047559
    %v376 = vsel %vm375, %v362, %v374
    %s378 = scalar_lea.vmem [#allocation3], %s320
    %vm379 = vcmask 64512
    %380 = vst.msk [vmem:[%s378] sm:$0xff] %vm379, %v376
    // Predicated region
    $region54: #{tpu_custom_call.1} parent=1 // pred_check
      %p381 = pneg %p92
    $region55: #{tpu_custom_call.1} parent=1 // pred_check_branch
      %383 = sbr.rel (%p381) target = $region57
    $region56: #{tpu_custom_call.1} parent=1 // pred_region
      %v384 = vld [vmem:[#allocation3] sm:$0xff]
      %v385 = vld [vmem:[#allocation3 + $0x8] sm:$0xff]
      %v386 = vld [vmem:[#allocation3 + $0x10] sm:$0xff]
      %v387 = vld [vmem:[#allocation3 + $0x18] sm:$0xff]
      %v388 = vld [vmem:[#allocation3 + $0x20] sm:$0xff]
      %v389 = vld [vmem:[#allocation3 + $0x28] sm:$0xff]
      %v390 = vld [vmem:[#allocation3 + $0x30] sm:$0xff]
      %v391 = vld [vmem:[#allocation3 + $0x38] sm:$0xff]
      %v392 = vld [vmem:[#allocation3 + $0x40] sm:$0xff]
      %v393 = vld [vmem:[#allocation3 + $0x48] sm:$0xff]
      %v394 = vld [vmem:[#allocation3 + $0x50] sm:$0xff]
      %v395 = vld [vmem:[#allocation3 + $0x58] sm:$0xff]
      %v396 = vld [vmem:[#allocation3 + $0x60] sm:$0xff]
      %v397 = vld [vmem:[#allocation3 + $0x68] sm:$0xff]
      %v398 = vld [vmem:[#allocation3 + $0x70] sm:$0xff]
      %v399 = vld [vmem:[#allocation3 + $0x78] sm:$0xff]
      %400 = vxpose.xlu0.b32.start [1/16] %v384, 128
      %401 = vxpose.xlu0.b32.cont [2/16] %v385, 128
      %402 = vxpose.xlu0.b32.cont [3/16] %v386, 128
      %403 = vxpose.xlu0.b32.cont [4/16] %v387, 128
      %404 = vxpose.xlu0.b32.cont [5/16] %v388, 128
      %405 = vxpose.xlu0.b32.cont [6/16] %v389, 128
      %406 = vxpose.xlu0.b32.cont [7/16] %v390, 128
      %407 = vxpose.xlu0.b32.cont [8/16] %v391, 128
      %408 = vxpose.xlu0.b32.cont [9/16] %v392, 128
      %409 = vxpose.xlu0.b32.cont [10/16] %v393, 128
      %410 = vxpose.xlu0.b32.cont [11/16] %v394, 128
      %411 = vxpose.xlu0.b32.cont [12/16] %v395, 128
      %412 = vxpose.xlu0.b32.cont [13/16] %v396, 128
      %413 = vxpose.xlu0.b32.cont [14/16] %v397, 128
      %414 = vxpose.xlu0.b32.cont [15/16] %v398, 128
      %415 = vxpose.xlu0.b32.end [16/16] %v399, 128
      %v416 = vpop.trf.xlu0
      %v417 = vpop.trf.xlu0
      %v418 = vpop.trf.xlu0
      %v419 = vpop.trf.xlu0
      %v420 = vpop.trf.xlu0
      %v421 = vpop.trf.xlu0
      %v422 = vpop.trf.xlu0
      %v423 = vpop.trf.xlu0
      %v424 = vpop.trf.xlu0
      %v425 = vpop.trf.xlu0
      %v426 = vpop.trf.xlu0
      %v427 = vpop.trf.xlu0
      %v428 = vpop.trf.xlu0
      %v429 = vpop.trf.xlu0
      %v430 = vpop.trf.xlu0
      %v431 = vpop.trf.xlu0
      %v432 = vld [vmem:[#allocation9] sm:$0xff]
      %vm433 = vcmp.eq.s32.totalorder %v432, 1
      %v434 = vsel %vm433, -1e+10, %v416
      %vm435 = vcmp.ge.s32.totalorder %v432, 2
      %v436 = vsel %vm435, -inf, %v434
      %437 = vmax.xlane.f32.xlu0 %v436
      %v438 = vpop.xlane.xlu0 %437
      %v439 = vsub.f32 %v436, %v438
      %v440 = vmul.f32 %v439, 1.442695
      %v441 = vpow.pop %v440
      %442 = vadd.xlane.f32.xlu0 %v441
      %v443 = vpop.xlane.xlu0 %442
      %v444 = vrcp.pop %v443
      %v445 = vmul.f32 %v441, %v444
      %446 = vst [vmem:[#allocation13] sm:$0xff] %v445
    $region57: #{tpu_custom_call.1} parent=1 // pred_fallthru
      _
    // Predicated region
    $region58: #{tpu_custom_call.1} parent=1 // pred_check
      _
    $region59: #{tpu_custom_call.1} parent=1 // pred_check_branch
      %448 = sbr.rel (0) target = $region61
    $region60: #{tpu_custom_call.1} parent=1 // pred_region
      %s450 = ssub.s32 128, 128
      %451 = vsyncadd [#allocation6], %s450
      %s453 = sshll.u32 [#allocation13], 4
      %s454 = int_to_ptr.vmem [resolvable:$true] %s453
      %456 = dma.vmem_to_hbm [thread:$0]  %s454, 128, %s7, [#allocation6]
    $region61: #{tpu_custom_call.1} parent=1 // pred_fallthru
      _
    // Predicated region
    $region62: #{tpu_custom_call.1} parent=1 // pred_check
      _
    $region63: #{tpu_custom_call.1} parent=1 // pred_check_branch
      %458 = sbr.rel (0) target = $region65
    $region64: #{tpu_custom_call.1} parent=1 // pred_region
      %459 = dma.done [#allocation6], 128
    $region65: #{tpu_custom_call.1} parent=1 // pred_fallthru
      _
    %460 = vsyncpa [#allocation5], 1
    %461 = vsyncpa [#allocation8], 1
    %462 = vsyncpa [#allocation11], 1
    %463 = vsyncpa [#allocation6], 1

</llo_original>
